<compile_context>
chip_gen: v6e
topology: v6e:2x2x1
jax: 0.10.0
libtpu: 0.0.40
codegen_flags: <defaults>
</compile_context>

<pallas_src>
import jax
import jax.numpy as jnp
from jax.experimental import pallas as pl
from jax.experimental.pallas import tpu as pltpu


def _ark_bert_pretrain_kernel(rows_ref, w_ref, b_ref, o_ref):
    """One grid step == (class tile c, row tile r).

    rows_ref: VMEM (TM, H)  bf16 -- gathered masked rows (row tile r)
    w_ref   : VMEM (H, TC)  bf16 -- weight tile (class tile c), pre-transposed
    b_ref   : VMEM (1, TC)  f32  -- bias tile
    o_ref   : VMEM (TM, TC) f32  -- dense logits block
    """
    o_ref[...] = jnp.dot(rows_ref[...], w_ref[...],
                         preferred_element_type=jnp.float32) + b_ref[...]


def _round_up(v, m):
    return (v + m - 1) // m * m


def ark_bert_pretrain(x, masked_position, weight, bias):
    """x: (B, S, H); masked_position: (B, M) int; weight: (C, H); bias: (C,).

    Returns (B, M, C) float32, matching ArkBertPretrain.forward.
    """
    B, S, H = x.shape
    C, Hw = weight.shape
    assert Hw == H
    M = masked_position.shape[1]

    # ---- Row gather (outside the kernel; tiny vs. the vocab matmul). ----
    n_rows = B * M
    tile_rows = 128                      # full-height MXU pushes even for small B*M
    n_pad = _round_up(max(n_rows, 1), tile_rows)
    flat_idx = (jnp.arange(B, dtype=jnp.int32)[:, None] * S
                + masked_position.astype(jnp.int32)).reshape(-1)
    # NOTE: out-of-range masked_position values are clamped by jnp.take
    # (PyTorch gather would error); documented divergence, not silent OOB.
    rows = jnp.take(x.reshape(B * S, H), flat_idx, axis=0).astype(jnp.bfloat16)
    rows = jnp.pad(rows, ((0, n_pad - n_rows), (0, 0)))

    # ---- Class (vocab) tiling: lane-aligned, padded (never tile_c = C). ----
    tile_c = min(1024, _round_up(C, 128))
    C_pad = _round_up(C, tile_c)
    # One-time weight prep (hoist out of the per-call path in deployment):
    # pad to C_pad, cast to bf16, transpose to (H, C_pad) for a canonical
    # MXU contraction with no in-kernel XLU transposes.
    w_t = jnp.pad(weight, ((0, C_pad - C), (0, 0))).astype(jnp.bfloat16).T
    b2 = jnp.pad(bias.astype(jnp.float32), (0, C_pad - C)).reshape(1, C_pad)

    num_c_tiles = C_pad // tile_c
    num_r_tiles = n_pad // tile_rows
    grid = (num_c_tiles, num_r_tiles)    # class OUTER -> each weight tile DMA'd once

    # VMEM budget: double-buffered rows/weight/bias/out tiles, clamped to the
    # chip's physical capacity minus headroom (v7x has only 64 MiB).
    vmem_est = 2 * (tile_rows * H * 2 + H * tile_c * 2 + tile_c * 4
                    + tile_rows * tile_c * 4)
    try:
        vmem_cap = pltpu.get_tpu_info().vmem_capacity_bytes
    except Exception:
        vmem_cap = 64 * 1024 * 1024
    vmem_limit = int(min(vmem_cap - 8 * 1024 * 1024,
                         max(32 * 1024 * 1024, 2 * vmem_est)))

    out_padded = pl.pallas_call(
        _ark_bert_pretrain_kernel,
        out_shape=jax.ShapeDtypeStruct((n_pad, C_pad), jnp.float32),
        grid=grid,
        in_specs=[
            pl.BlockSpec((tile_rows, H), lambda c, r: (r, 0)),   # gathered rows
            pl.BlockSpec((H, tile_c), lambda c, r: (0, c)),      # weight tile
            pl.BlockSpec((1, tile_c), lambda c, r: (0, c)),      # bias tile
        ],
        out_specs=pl.BlockSpec((tile_rows, tile_c), lambda c, r: (r, c)),
        compiler_params=pltpu.CompilerParams(
            dimension_semantics=("parallel", "parallel"),
            vmem_limit_bytes=vmem_limit),
    )(rows, w_t, b2)

    return out_padded[:n_rows, :C].reshape(B, M, C)


def _reference_f32(x, masked_position, weight, bias):
    """Pure-JAX f32 reference mirroring the PyTorch forward exactly."""
    y = jnp.einsum("bsh,ch->bsc", x, weight) + bias
    return jnp.take_along_axis(
        y, masked_position[:, :, None].astype(jnp.int32), axis=1)


def _reference_bf16(x, masked_position, weight, bias):
    """Reference with the same bf16-operand / f32-accumulate numerics."""
    y = jnp.einsum("bsh,ch->bsc",
                   x.astype(jnp.bfloat16), weight.astype(jnp.bfloat16),
                   preferred_element_type=jnp.float32) + bias.astype(jnp.float32)
    return jnp.take_along_axis(
        y, masked_position[:, :, None].astype(jnp.int32), axis=1)


if __name__ == "__main__":
    # Small shapes consistent with the module's forward.  C is deliberately
    # NOT a multiple of 128 and spans multiple class tiles so both the class
    # padding and the multi-tile vocab axis are exercised.
    B, S, H, C, M = 2, 16, 32, 2500, 4

    key = jax.random.PRNGKey(0)
    kx, kw, kb, km = jax.random.split(key, 4)

    x = jax.random.normal(kx, (B, S, H), dtype=jnp.float32)
    weight = jax.random.normal(kw, (C, H), dtype=jnp.float32) * (1.0 / jnp.sqrt(H))
    bias = jax.random.normal(kb, (C,), dtype=jnp.float32) * 0.01
    masked_position = jax.random.randint(km, (B, M), 0, S, dtype=jnp.int32)

    out = ark_bert_pretrain(x, masked_position, weight, bias)
    out = jax.block_until_ready(out)
    assert out.shape == (B, M, C)

    # Tight check against a reference with matching bf16-operand numerics.
    ref_bf16 = _reference_bf16(x, masked_position, weight, bias)
    assert jnp.allclose(out, ref_bf16, atol=1e-3, rtol=1e-3), "mismatch vs bf16 reference"

    # Sanity check against the exact f32 PyTorch-equivalent semantics.
    ref_f32 = _reference_f32(x, masked_position, weight, bias)
    assert jnp.allclose(out, ref_f32, atol=5e-2, rtol=5e-2), "mismatch vs f32 reference"

    print("KERNEL_OK")
</pallas_src>

<mosaic_0001>
module attributes {stable_mosaic.version = 11 : i64} {
  func.func @_ark_bert_pretrain_kernel(%arg0: i32, %arg1: i32, %arg2: memref<128x32xbf16, #tpu.memory_space<vmem>>, %arg3: memref<32x1024xbf16, #tpu.memory_space<vmem>>, %arg4: memref<1x1024xf32, #tpu.memory_space<vmem>>, %arg5: memref<128x1024xf32, #tpu.memory_space<vmem>>) attributes {dimension_semantics = [#tpu.dimension_semantics<parallel>, #tpu.dimension_semantics<parallel>], iteration_bounds = array<i64: 3, 1>, scalar_prefetch = 0 : i64, scratch_operands = 0 : i64, tpu.core_type = #tpu.core_type<tc>, window_params = [{transform_indices = @transform_0, window_bounds = array<i64: 128, 32>}, {transform_indices = @transform_1, window_bounds = array<i64: 32, 1024>}, {transform_indices = @transform_2, window_bounds = array<i64: 1, 1024>}, {transform_indices = @transform_3, window_bounds = array<i64: 128, 1024>}]} {
    %c0 = arith.constant 0 : index
    %c0_0 = arith.constant 0 : index
    %0 = vector.load %arg2[%c0, %c0_0] : memref<128x32xbf16, #tpu.memory_space<vmem>>, vector<128x32xbf16>
    %c0_1 = arith.constant 0 : index
    %c0_2 = arith.constant 0 : index
    %1 = vector.load %arg3[%c0_1, %c0_2] : memref<32x1024xbf16, #tpu.memory_space<vmem>>, vector<32x1024xbf16>
    %cst = arith.constant dense<0.000000e+00> : vector<128x1024xf32>
    %2 = tpu.matmul %0, %1, %cst {dimension_numbers = #tpu.dot_dimension_numbers<[1], [0], [0], [1], [0, 0, 1, 1], [], []>} : vector<128x32xbf16>, vector<32x1024xbf16>, vector<128x1024xf32> -> vector<128x1024xf32>
    %c0_3 = arith.constant 0 : index
    %c0_4 = arith.constant 0 : index
    %3 = vector.load %arg4[%c0_3, %c0_4] : memref<1x1024xf32, #tpu.memory_space<vmem>>, vector<1x1024xf32>
    %4 = vector.broadcast %3 : vector<1x1024xf32> to vector<128x1024xf32>
    %5 = arith.addf %2, %4 : vector<128x1024xf32>
    %c0_5 = arith.constant 0 : index
    %c0_6 = arith.constant 0 : index
    %6 = vector.load %arg5[%c0_5, %c0_6] : memref<128x1024xf32, #tpu.memory_space<vmem>>, vector<128x1024xf32>
    tpu.vector_store %arg5[%c0_5, %c0_6], %5 {strides = array<i32>} : memref<128x1024xf32, #tpu.memory_space<vmem>>, vector<128x1024xf32>,
    return
  }
  func.func @transform_0(%arg0: i32, %arg1: i32) -> (i32, i32) {
    %c0_i32 = arith.constant 0 : i32
    %c0_i32_0 = arith.constant 0 : i32
    return %arg1, %c0_i32 : i32, i32
  }
  func.func @transform_1(%arg0: i32, %arg1: i32) -> (i32, i32) {
    %c0_i32 = arith.constant 0 : i32
    %c0_i32_0 = arith.constant 0 : i32
    return %c0_i32, %arg0 : i32, i32
  }
  func.func @transform_2(%arg0: i32, %arg1: i32) -> (i32, i32) {
    %c0_i32 = arith.constant 0 : i32
    %c0_i32_0 = arith.constant 0 : i32
    return %c0_i32, %arg0 : i32, i32
  }
  func.func @transform_3(%arg0: i32, %arg1: i32) -> (i32, i32) {
    %c0_i32 = arith.constant 0 : i32
    return %arg1, %arg0 : i32, i32
  }
}

</mosaic_0001>

<llo_original>
// kernel: tpu_custom_call.1
$region0: #{tpu_custom_call.1}
  #allocation0 [shape = 'u32[]', space=smem, size = 0x4, offset = 0x4, fixed_abs, tag = 'smem constant byte address 0x4 - core index']
  #allocation1 [shape = 'u32[144,128]{1,0:T(1,128)}', space=vmem, size = 0x12000, scoped, tag = 'internal scratch']
  %s0 = inlined_call_operand.vmem [shape: bf16[128,32], index: 0, kind: input, shape index: {}]
  %s1 = inlined_call_operand.hbm [shape: bf16[32,3072], index: 1, kind: input, shape index: {}]
  %s2 = inlined_call_operand.hbm [shape: f32[1,3072], index: 2, kind: input, shape index: {}]
  %s3 = inlined_call_operand.hbm [shape: f32[128,3072], index: 3, kind: output, shape index: {}]
  %s4 = sld [smem:[#allocation0]]
  $region53: #{tpu_custom_call.1} parent=0
    _
  %s6 = ssub.s32 1, %s4
  %s7 = scalar_select 0, %s6, %s4
  $region1: #{tpu_custom_call.1} parent=0
    #allocation2 [shape = 'u8[131072]{0}', space=vmem, size = 0x20000, scoped, tag = 'input window, operand 1']
    #allocation3 [shape = 's32[2]{0}', space=sflag, size = 0x8, scoped, tag = 'scoped memory for tpu_custom_call.1']
    #allocation4 [shape = 's32[2]{0}', space=sflag, size = 0x8, scoped, tag = 'scoped memory for tpu_custom_call.1']
    #allocation5 [shape = 'u8[8192]{0}', space=vmem, size = 0x2000, scoped, tag = 'input window, operand 2']
    #allocation6 [shape = 's32[2]{0}', space=sflag, size = 0x8, scoped, tag = 'scoped memory for tpu_custom_call.1']
    #allocation7 [shape = 'u8[1048576]{0}', space=vmem, size = 0x100000, scoped, tag = 'output window, operand 0']
    %8 = vsyncpa [#allocation3], 0
    %s9 = scalar_lea.sflag [#allocation3], 1
    %10 = vsyncpa %s9, 0
    %11 = vsyncpa [#allocation6], 0
    %s12 = scalar_lea.sflag [#allocation6], 1
    %13 = vsyncpa %s12, 0
    %14 = vsyncpa [#allocation4], 0
    %s15 = scalar_lea.sflag [#allocation4], 1
    %16 = vsyncpa %s15, 0
    loop: start=0, step=1, limit=5
    $region2: #{tpu_custom_call.1} parent=1 // loop_pre_header
      _
    $region3: #{tpu_custom_call.1} parent=1 // loop_header
      %s18 = sphi 0, %s22
      %p19 = scmp.ge.s32.totalorder %s18, 5
      %s25 = sphi 0, %s37
      %s26 = sphi 0, %s33
      %s27 = sphi 0, %s25
      %s28 = sphi 0, %s26
      %s29 = sphi 0, %s27
      %s30 = sphi 0, %s28
      %s40 = sphi 0, %s42
      %s43 = sphi 0, %s40
      %s44 = sphi 0, %s43
      %s60 = sphi 0, %s44
      %s66 = sphi 0, %s68
      %s69 = sphi 0, %s66
      %s70 = sphi 0, %s69
      %s86 = sphi 0, %s70
      %s92 = sphi 0, %s94
      %s95 = sphi 0, %s92
      %s96 = sphi 0, %s95
      %s112 = sphi 0, %s96
      %s120 = sphi 0, %s122
      %s123 = sphi 0, %s120
      %s124 = sphi 0, %s123
      %s140 = sphi 0, %s124
    $region4: #{tpu_custom_call.1} parent=1 // loop_header_branch
      %21 = sbr.rel (%p19) target = $region8
    $region5: #{tpu_custom_call.1} parent=1 // loop_body
      %s23 = ssub.s32 %s18, 1
      %s24 = ssub.s32 %s18, 2
      %s31 = sadd.s32 1, %s26
      %p32 = scmp.ge.s32.totalorder %s31, 1
      %s33 = scalar_select %p32, 0, %s31
      %s34 = sadd.s32 1, %s25
      %s35 = scalar_select %p32, %s34, %s25
      %p36 = scmp.ge.s32.totalorder %s35, 3
      %s37 = scalar_select %p36, 0, %s35
      %s38 = ssub.s32 %s26, %s33
      %p39 = scmp.eq.s32.totalorder %s38, 0
      %s41 = sadd.s32 %s40, 1
      %s42 = scalar_select %p39, %s40, %s41
      %p45 = pneg %p39
      %p46 = scmp.eq.s32.totalorder %s18, 2
      %p47 = por %p45, %p46
      %p48 = scmp.ne.s32.totalorder %s40, %s43
      %p49 = scmp.eq.s32.totalorder %s18, 0
      %p50 = por %p48, %p49
      %p51 = scmp.ne.s32.totalorder %s40, %s43
      %p52 = scmp.eq.s32.totalorder %s23, 2
      %p53 = por %p51, %p52
      %p54 = scmp.ne.s32.totalorder %s43, %s44
      %p55 = scmp.eq.s32.totalorder %s23, 0
      %p56 = por %p54, %p55
      %p57 = scmp.ne.s32.totalorder %s43, %s44
      %p58 = scmp.eq.s32.totalorder %s24, 2
      %p59 = por %p57, %p58
      %p61 = scmp.ne.s32.totalorder %s44, %s60
      %p62 = scmp.eq.s32.totalorder %s24, 0
      %p63 = por %p61, %p62
      %s64 = ssub.s32 %s25, %s37
      %p65 = scmp.eq.s32.totalorder %s64, 0
      %s67 = sadd.s32 %s66, 1
      %s68 = scalar_select %p65, %s66, %s67
      %p71 = pneg %p65
      %p72 = scmp.eq.s32.totalorder %s18, 2
      %p73 = por %p71, %p72
      %p74 = scmp.ne.s32.totalorder %s66, %s69
      %p75 = scmp.eq.s32.totalorder %s18, 0
      %p76 = por %p74, %p75
      %p77 = scmp.ne.s32.totalorder %s66, %s69
      %p78 = scmp.eq.s32.totalorder %s23, 2
      %p79 = por %p77, %p78
      %p80 = scmp.ne.s32.totalorder %s69, %s70
      %p81 = scmp.eq.s32.totalorder %s23, 0
      %p82 = por %p80, %p81
      %p83 = scmp.ne.s32.totalorder %s69, %s70
      %p84 = scmp.eq.s32.totalorder %s24, 2
      %p85 = por %p83, %p84
      %p87 = scmp.ne.s32.totalorder %s70, %s86
      %p88 = scmp.eq.s32.totalorder %s24, 0
      %p89 = por %p87, %p88
      %s90 = ssub.s32 %s25, %s37
      %p91 = scmp.eq.s32.totalorder %s90, 0
      %s93 = sadd.s32 %s92, 1
      %s94 = scalar_select %p91, %s92, %s93
      %p97 = pneg %p91
      %p98 = scmp.eq.s32.totalorder %s18, 2
      %p99 = por %p97, %p98
      %p100 = scmp.ne.s32.totalorder %s92, %s95
      %p101 = scmp.eq.s32.totalorder %s18, 0
      %p102 = por %p100, %p101
      %p103 = scmp.ne.s32.totalorder %s92, %s95
      %p104 = scmp.eq.s32.totalorder %s23, 2
      %p105 = por %p103, %p104
      %p106 = scmp.ne.s32.totalorder %s95, %s96
      %p107 = scmp.eq.s32.totalorder %s23, 0
      %p108 = por %p106, %p107
      %p109 = scmp.ne.s32.totalorder %s95, %s96
      %p110 = scmp.eq.s32.totalorder %s24, 2
      %p111 = por %p109, %p110
      %p113 = scmp.ne.s32.totalorder %s96, %s112
      %p114 = scmp.eq.s32.totalorder %s24, 0
      %p115 = por %p113, %p114
      %s116 = ssub.s32 %s26, %s33
      %s117 = ssub.s32 %s25, %s37
      %s118 = sor.u32 %s116, %s117
      %p119 = scmp.eq.s32.totalorder %s118, 0
      %s121 = sadd.s32 %s120, 1
      %s122 = scalar_select %p119, %s120, %s121
      %p125 = pneg %p119
      %p126 = scmp.eq.s32.totalorder %s18, 2
      %p127 = por %p125, %p126
      %p128 = scmp.ne.s32.totalorder %s120, %s123
      %p129 = scmp.eq.s32.totalorder %s18, 0
      %p130 = por %p128, %p129
      %p131 = scmp.ne.s32.totalorder %s120, %s123
      %p132 = scmp.eq.s32.totalorder %s23, 2
      %p133 = por %p131, %p132
      %p134 = scmp.ne.s32.totalorder %s123, %s124
      %p135 = scmp.eq.s32.totalorder %s23, 0
      %p136 = por %p134, %p135
      %p137 = scmp.ne.s32.totalorder %s123, %s124
      %p138 = scmp.eq.s32.totalorder %s24, 2
      %p139 = por %p137, %p138
      %p141 = scmp.ne.s32.totalorder %s124, %s140
      %p142 = scmp.eq.s32.totalorder %s24, 0
      %p143 = por %p141, %p142
      %p144 = scmp.le.s32.totalorder 1, %s18
      %p145 = scmp.lt.s32.totalorder %s18, 4
      %p146 = pnand %p144, %p145
      %p147 = pneg %p146
      // Predicated region
      $region9: #{tpu_custom_call.1} parent=5 // pred_check
        _
      $region10: #{tpu_custom_call.1} parent=5 // pred_check_branch
        %149 = sbr.rel (%p146) target = $region12
      $region11: #{tpu_custom_call.1} parent=5 // pred_region
        %s150 = ssub.s32 %s18, 1
        // Predicated region
        $region13: #{tpu_custom_call.1} parent=11 // pred_check
          %p151 = pneg %p56
        $region14: #{tpu_custom_call.1} parent=11 // pred_check_branch
          %153 = sbr.rel (%p151) target = $region16
        $region15: #{tpu_custom_call.1} parent=11 // pred_region
          %s154 = smul.u32 16, %s28
          %p155 = scmp.lt.s32.totalorder %s154, 15
          %s156 = scalar_select %p155, %s154, 15
          %s157 = smul.addr %s156, 4
          %s158 = scalar_lea.vmem %s0, %s157
          %s159 = smul.u32 16, %s28
        $region16: #{tpu_custom_call.1} parent=11 // pred_fallthru
          _
      $region12: #{tpu_custom_call.1} parent=5 // pred_fallthru
        _
      %p160 = scmp.lt.s32.totalorder %s18, 3
      // Predicated region
      $region17: #{tpu_custom_call.1} parent=5 // pred_check
        %p161 = pneg %p160
      $region18: #{tpu_custom_call.1} parent=5 // pred_check_branch
        %163 = sbr.rel (%p161) target = $region20
      $region19: #{tpu_custom_call.1} parent=5 // pred_region
        // Predicated region
        $region21: #{tpu_custom_call.1} parent=19 // pred_check
          %p164 = pneg %p76
        $region22: #{tpu_custom_call.1} parent=19 // pred_check_branch
          %166 = sbr.rel (%p164) target = $region24
        $region23: #{tpu_custom_call.1} parent=19 // pred_region
          %s167 = sand.u32 %s66, 1
          %s168 = scalar_lea.sflag [#allocation3], %s167
          %s169 = sand.u32 %s66, 1
          %s170 = smul.addr %s169, 128
          %s171 = scalar_lea.vmem [#allocation2], %s170
          %s172 = smul.u32 8, %s25
          %s174 = ssub.s32 2048, 2048
          %175 = vsyncadd %s168, %s174
          %s176 = smul.addr %s172, 64
          %s177 = scalar_lea.hbm %s1, %s176
          %s178 = sshll.u32 %s171, 4
          %s179 = int_to_ptr.vmem [resolvable:$true] %s178
          %184 = dma.hbm_to_vmem [thread:$0]  %s177, 2048, %s179, %s168, 1536, 512, 32
        $region24: #{tpu_custom_call.1} parent=19 // pred_fallthru
          _
        // Predicated region
        $region25: #{tpu_custom_call.1} parent=19 // pred_check
          %p185 = pneg %p102
        $region26: #{tpu_custom_call.1} parent=19 // pred_check_branch
          %187 = sbr.rel (%p185) target = $region28
        $region27: #{tpu_custom_call.1} parent=19 // pred_region
          %s188 = sand.u32 %s92, 1
          %s189 = scalar_lea.sflag [#allocation6], %s188
          %s190 = sand.u32 %s92, 1
          %s191 = smul.addr %s190, 8
          %s192 = scalar_lea.vmem [#allocation5], %s191
          %s193 = smul.u32 8, %s25
          %s195 = ssub.s32 128, 128
          %196 = vsyncadd %s189, %s195
          %s197 = smul.addr %s193, 16
          %s198 = scalar_lea.hbm %s2, %s197
          %s200 = sshll.u32 %s192, 4
          %s201 = int_to_ptr.vmem [resolvable:$true] %s200
          %203 = dma.hbm_to_vmem [thread:$0]  %s198, 128, %s201, %s189
        $region28: #{tpu_custom_call.1} parent=19 // pred_fallthru
          _
      $region20: #{tpu_custom_call.1} parent=5 // pred_fallthru
        _
      %p204 = scmp.le.s32.totalorder 1, %s18
      %p205 = scmp.lt.s32.totalorder %s18, 4
      %p206 = pnand %p204, %p205
      %p207 = pneg %p206
      // Predicated region
      $region29: #{tpu_custom_call.1} parent=5 // pred_check
        _
      $region30: #{tpu_custom_call.1} parent=5 // pred_check_branch
        %209 = sbr.rel (%p206) target = $region32
      $region31: #{tpu_custom_call.1} parent=5 // pred_region
        %s210 = ssub.s32 %s18, 1
        %s211 = sand.u32 %s69, 1
        %s212 = scalar_lea.sflag [#allocation3], %s211
        %s213 = sand.u32 %s69, 1
        %s214 = smul.addr %s213, 128
        %s215 = scalar_lea.vmem [#allocation2], %s214
        // Predicated region
        $region33: #{tpu_custom_call.1} parent=31 // pred_check
          %p216 = pneg %p82
        $region34: #{tpu_custom_call.1} parent=31 // pred_check_branch
          %218 = sbr.rel (%p216) target = $region36
        $region35: #{tpu_custom_call.1} parent=31 // pred_region
          %219 = dma.done %s212, 2048
        $region36: #{tpu_custom_call.1} parent=31 // pred_fallthru
          _
        %s220 = sand.u32 %s95, 1
        %s221 = scalar_lea.sflag [#allocation6], %s220
        %s222 = sand.u32 %s95, 1
        %s223 = smul.addr %s222, 8
        %s224 = scalar_lea.vmem [#allocation5], %s223
        // Predicated region
        $region37: #{tpu_custom_call.1} parent=31 // pred_check
          %p225 = pneg %p108
        $region38: #{tpu_custom_call.1} parent=31 // pred_check_branch
          %227 = sbr.rel (%p225) target = $region40
        $region39: #{tpu_custom_call.1} parent=31 // pred_region
          %228 = dma.done %s221, 128
        $region40: #{tpu_custom_call.1} parent=31 // pred_fallthru
          _
        %s229 = smul.u32 16, %s28
        %p230 = scmp.lt.s32.totalorder %s229, 15
        %s231 = scalar_select %p230, %s229, 15
        %s232 = smul.addr %s231, 4
        %s233 = scalar_lea.vmem %s0, %s232
        %p234 = pneg %p56
        %p235 = pneg %p53
        %s236 = sand.u32 %s69, 1
        %s237 = scalar_lea.sflag [#allocation3], %s236
        %s238 = sand.u32 %s69, 1
        %s239 = smul.addr %s238, 128
        %s240 = scalar_lea.vmem [#allocation2], %s239
        %p241 = pneg %p82
        %p242 = pneg %p79
        %s243 = sand.u32 %s95, 1
        %s244 = scalar_lea.sflag [#allocation6], %s243
        %s245 = sand.u32 %s95, 1
        %s246 = smul.addr %s245, 8
        %s247 = scalar_lea.vmem [#allocation5], %s246
        %p248 = pneg %p108
        %p249 = pneg %p105
        %p250 = pneg %p136
        %p251 = pneg %p133
        %s252 = sand.u32 %s123, 1
        %s253 = scalar_lea.sflag [#allocation4], %s252
        %s254 = sand.u32 %s123, 1
        %s255 = smul.addr %s254, 1024
        %s256 = scalar_lea.vmem [#allocation7], %s255
        %s257 = smul.u32 16, %s28
        %p258 = scmp.lt.s32.totalorder %s257, 15
        %s259 = scalar_select %p258, %s257, 15
        %s260 = smul.addr %s259, 4
        %s261 = scalar_lea.vmem %s0, %s260
        %s262 = smul.u32 16, %s28
        %s263 = smul.u32 8, %s27
        %s264 = smul.u32 8, %s27
        %s265 = smul.u32 16, %s28
        %s266 = smul.u32 8, %s27
        %v268 = vld [vmem:[%s261] sm:$0xf]
        %v269 = vld [vmem:[%s261 + $0x4] sm:$0xf]
        %v270 = vld [vmem:[%s261 + $0x8] sm:$0xf]
        %v271 = vld [vmem:[%s261 + $0xc] sm:$0xf]
        %v272 = vld [vmem:[%s261 + $0x10] sm:$0xf]
        %v273 = vld [vmem:[%s261 + $0x14] sm:$0xf]
        %v274 = vld [vmem:[%s261 + $0x18] sm:$0xf]
        %v275 = vld [vmem:[%s261 + $0x1c] sm:$0xf]
        %v276 = vld [vmem:[%s261 + $0x20] sm:$0xf]
        %v277 = vld [vmem:[%s261 + $0x24] sm:$0xf]
        %v278 = vld [vmem:[%s261 + $0x28] sm:$0xf]
        %v279 = vld [vmem:[%s261 + $0x2c] sm:$0xf]
        %v280 = vld [vmem:[%s261 + $0x30] sm:$0xf]
        %v281 = vld [vmem:[%s261 + $0x34] sm:$0xf]
        %v282 = vld [vmem:[%s261 + $0x38] sm:$0xf]
        %v283 = vld [vmem:[%s261 + $0x3c] sm:$0xf]
        %v284 = vld [vmem:[%s215] sm:$0xff]
        %v285 = vld [vmem:[%s215 + $0x8] sm:$0xff]
        %v286 = vld [vmem:[%s215 + $0x10] sm:$0xff]
        %v287 = vld [vmem:[%s215 + $0x18] sm:$0xff]
        %v288 = vld [vmem:[%s215 + $0x20] sm:$0xff]
        %v289 = vld [vmem:[%s215 + $0x28] sm:$0xff]
        %v290 = vld [vmem:[%s215 + $0x30] sm:$0xff]
        %v291 = vld [vmem:[%s215 + $0x38] sm:$0xff]
        %v292 = vld [vmem:[%s215 + $0x40] sm:$0xff]
        %v293 = vld [vmem:[%s215 + $0x48] sm:$0xff]
        %v294 = vld [vmem:[%s215 + $0x50] sm:$0xff]
        %v295 = vld [vmem:[%s215 + $0x58] sm:$0xff]
        %v296 = vld [vmem:[%s215 + $0x60] sm:$0xff]
        %v297 = vld [vmem:[%s215 + $0x68] sm:$0xff]
        %v298 = vld [vmem:[%s215 + $0x70] sm:$0xff]
        %v299 = vld [vmem:[%s215 + $0x78] sm:$0xff]
        %v300 = vld [vmem:[%s224] sm:$0xff]
        %v302 = vlaneseq
        %v303 = vshrl.u32 %v302, 7
        %v304 = vsub.s32 0, %v303
        %v305 = vrot.slane %v300, %v304
        %v306 = vlaneseq
        %v307 = vshrl.u32 %v306, 7
        %v308 = vsub.s32 1, %v307
        %v309 = vrot.slane %v300, %v308
        %v310 = vlaneseq
        %v311 = vshrl.u32 %v310, 7
        %v312 = vsub.s32 2, %v311
        %v313 = vrot.slane %v300, %v312
        %v314 = vlaneseq
        %v315 = vshrl.u32 %v314, 7
        %v316 = vsub.s32 3, %v315
        %v317 = vrot.slane %v300, %v316
        %v318 = vlaneseq
        %v319 = vshrl.u32 %v318, 7
        %v320 = vsub.s32 4, %v319
        %v321 = vrot.slane %v300, %v320
        %v322 = vlaneseq
        %v323 = vshrl.u32 %v322, 7
        %v324 = vsub.s32 5, %v323
        %v325 = vrot.slane %v300, %v324
        %v326 = vlaneseq
        %v327 = vshrl.u32 %v326, 7
        %v328 = vsub.s32 6, %v327
        %v329 = vrot.slane %v300, %v328
        %v330 = vlaneseq
        %v331 = vshrl.u32 %v330, 7
        %v332 = vsub.s32 7, %v331
        %v333 = vrot.slane %v300, %v332
        %v358 = vunpack.c.l.b16 %v268
        %v359 = vunpack.c.l.b16 %v269
        %v360 = vunpack.c.l.b16 %v270
        %v361 = vunpack.c.l.b16 %v271
        %v362 = vunpack.c.l.b16 %v272
        %v363 = vunpack.c.l.b16 %v273
        %v364 = vunpack.c.l.b16 %v274
        %v365 = vunpack.c.l.b16 %v275
        %v366 = vunpack.c.l.b16 %v276
        %v367 = vunpack.c.l.b16 %v277
        %v368 = vunpack.c.l.b16 %v278
        %v369 = vunpack.c.l.b16 %v279
        %v370 = vunpack.c.l.b16 %v280
        %v371 = vunpack.c.l.b16 %v281
        %v372 = vunpack.c.l.b16 %v282
        %v373 = vunpack.c.l.b16 %v283
        %v374 = vpack.c.b16 %v359, %v358
        %v375 = vpack.c.b16 %v361, %v360
        %v376 = vpack.c.b16 %v363, %v362
        %v377 = vpack.c.b16 %v365, %v364
        %v378 = vpack.c.b16 %v367, %v366
        %v379 = vpack.c.b16 %v369, %v368
        %v380 = vpack.c.b16 %v371, %v370
        %v381 = vpack.c.b16 %v373, %v372
        %v398 = vunpack.c.l.b16 %v284
        %v399 = vunpack.c.h.b16 %v284
        %v400 = vunpack.c.l.b16 %v285
        %v401 = vunpack.c.h.b16 %v285
        %v402 = vunpack.c.l.b16 %v286
        %v403 = vunpack.c.h.b16 %v286
        %v404 = vunpack.c.l.b16 %v287
        %v405 = vunpack.c.h.b16 %v287
        %v406 = vunpack.c.l.b16 %v288
        %v407 = vunpack.c.h.b16 %v288
        %v408 = vunpack.c.l.b16 %v289
        %v409 = vunpack.c.h.b16 %v289
        %v410 = vunpack.c.l.b16 %v290
        %v411 = vunpack.c.h.b16 %v290
        %v412 = vunpack.c.l.b16 %v291
        %v413 = vunpack.c.h.b16 %v291
        %v414 = vunpack.c.l.b16 %v292
        %v415 = vunpack.c.h.b16 %v292
        %v416 = vunpack.c.l.b16 %v293
        %v417 = vunpack.c.h.b16 %v293
        %v418 = vunpack.c.l.b16 %v294
        %v419 = vunpack.c.h.b16 %v294
        %v420 = vunpack.c.l.b16 %v295
        %v421 = vunpack.c.h.b16 %v295
        %v422 = vunpack.c.l.b16 %v296
        %v423 = vunpack.c.h.b16 %v296
        %v424 = vunpack.c.l.b16 %v297
        %v425 = vunpack.c.h.b16 %v297
        %v426 = vunpack.c.l.b16 %v298
        %v427 = vunpack.c.h.b16 %v298
        %v428 = vunpack.c.l.b16 %v299
        %v429 = vunpack.c.h.b16 %v299
        %v430 = vpack.c.b16 %v406, %v398
        %v431 = vpack.c.b16 %v407, %v399
        %v432 = vpack.c.b16 %v408, %v400
        %v433 = vpack.c.b16 %v409, %v401
        %v434 = vpack.c.b16 %v410, %v402
        %v435 = vpack.c.b16 %v411, %v403
        %v436 = vpack.c.b16 %v412, %v404
        %v437 = vpack.c.b16 %v413, %v405
        %v438 = vpack.c.b16 %v422, %v414
        %v439 = vpack.c.b16 %v423, %v415
        %v440 = vpack.c.b16 %v424, %v416
        %v441 = vpack.c.b16 %v425, %v417
        %v442 = vpack.c.b16 %v426, %v418
        %v443 = vpack.c.b16 %v427, %v419
        %v444 = vpack.c.b16 %v428, %v420
        %v445 = vpack.c.b16 %v429, %v421
        %vm462 = vcmask 261120
        %v464 = vsel %vm462, %v374, 0
        %v467 = vsel %vm462, %v375, 0
        %v470 = vsel %vm462, %v376, 0
        %v473 = vsel %vm462, %v377, 0
        %v476 = vsel %vm462, %v378, 0
        %v479 = vsel %vm462, %v379, 0
        %v482 = vsel %vm462, %v380, 0
        %v485 = vsel %vm462, %v381, 0
        %487 = vmatprep.subr.bf16.mxu0 0
        %488 = vmatpush1.bf16.msra.mxu0 0
        %489 = vmatprep.subr.bf16.mxu0 0
        %490 = vmatpush1.bf16.msra.mxu0 0
        %491 = vmatprep.subr.bf16.mxu0 0
        %492 = vmatpush1.bf16.msra.mxu0 0
        %493 = vmatprep.subr.bf16.mxu0 0
        %494 = vmatpush1.bf16.msra.mxu0 0
        %495 = vmatprep.subr.bf16.mxu0 0
        %496 = vmatpush1.bf16.msra.mxu0 0
        %497 = vmatprep.subr.bf16.mxu0 0
        %498 = vmatpush1.bf16.msra.mxu0 0
        %499 = vmatprep.subr.bf16.mxu0 %v439
        %500 = vmatpush1.bf16.msra.mxu0 %v438
        %501 = vmatprep.subr.bf16.mxu0 %v431
        %502 = vmatpush1.bf16.msra.mxu0 %v430
        %503 = vmatprep.subr.bf16.mxu0 0
        %504 = vmatpush2.bf16.msra.mxu0 0
        %505 = vmatprep.subr.bf16.mxu0 0
        %506 = vmatpush2.bf16.msra.mxu0 0
        %507 = vmatprep.subr.bf16.mxu0 0
        %508 = vmatpush2.bf16.msra.mxu0 0
        %509 = vmatprep.subr.bf16.mxu0 0
        %510 = vmatpush2.bf16.msra.mxu0 0
        %511 = vmatprep.subr.bf16.mxu0 0
        %512 = vmatpush2.bf16.msra.mxu0 0
        %513 = vmatprep.subr.bf16.mxu0 0
        %514 = vmatpush2.bf16.msra.mxu0 0
        %515 = vmatprep.subr.bf16.mxu0 0
        %516 = vmatpush2.bf16.msra.mxu0 0
        %517 = vmatprep.subr.bf16.mxu0 0
        %518 = vmatpush2.bf16.msra.mxu0 0
        %519 = vmatprep.mubr.bf16.mxu0 0
        %520 = vmatmul.mubr.bf16.gmra.mxu0 %v464
        %v521 = vpop.f32.mrf.mxu0
        %v522 = vadd.f32 %v305, %v521
        %v523 = vpop.f32.mrf.mxu0
        %v524 = vadd.f32 %v309, %v523
        %v525 = vpop.f32.mrf.mxu0
        %v526 = vadd.f32 %v305, %v525
        %v527 = vpop.f32.mrf.mxu0
        %v528 = vadd.f32 %v309, %v527
        %529 = vmatprep.mubr.bf16.mxu0 0
        %530 = vmatmul.mubr.bf16.gmra.mxu0 %v467
        %v531 = vpop.f32.mrf.mxu0
        %v532 = vadd.f32 %v305, %v531
        %v533 = vpop.f32.mrf.mxu0
        %v534 = vadd.f32 %v309, %v533
        %v535 = vpop.f32.mrf.mxu0
        %v536 = vadd.f32 %v305, %v535
        %v537 = vpop.f32.mrf.mxu0
        %v538 = vadd.f32 %v309, %v537
        %539 = vmatprep.mubr.bf16.mxu0 0
        %540 = vmatmul.mubr.bf16.gmra.mxu0 %v470
        %v541 = vpop.f32.mrf.mxu0
        %v542 = vadd.f32 %v305, %v541
        %v543 = vpop.f32.mrf.mxu0
        %v544 = vadd.f32 %v309, %v543
        %v545 = vpop.f32.mrf.mxu0
        %v546 = vadd.f32 %v305, %v545
        %v547 = vpop.f32.mrf.mxu0
        %v548 = vadd.f32 %v309, %v547
        %549 = vmatprep.mubr.bf16.mxu0 0
        %550 = vmatmul.mubr.bf16.gmra.mxu0 %v473
        %v551 = vpop.f32.mrf.mxu0
        %v552 = vadd.f32 %v305, %v551
        %v553 = vpop.f32.mrf.mxu0
        %v554 = vadd.f32 %v309, %v553
        %v555 = vpop.f32.mrf.mxu0
        %v556 = vadd.f32 %v305, %v555
        %v557 = vpop.f32.mrf.mxu0
        %v558 = vadd.f32 %v309, %v557
        %559 = vmatprep.mubr.bf16.mxu0 0
        %560 = vmatmul.mubr.bf16.gmra.mxu0 %v476
        %v561 = vpop.f32.mrf.mxu0
        %v562 = vadd.f32 %v305, %v561
        %v563 = vpop.f32.mrf.mxu0
        %v564 = vadd.f32 %v309, %v563
        %v565 = vpop.f32.mrf.mxu0
        %v566 = vadd.f32 %v305, %v565
        %v567 = vpop.f32.mrf.mxu0
        %v568 = vadd.f32 %v309, %v567
        %569 = vmatprep.mubr.bf16.mxu0 0
        %570 = vmatmul.mubr.bf16.gmra.mxu0 %v479
        %v571 = vpop.f32.mrf.mxu0
        %v572 = vadd.f32 %v305, %v571
        %v573 = vpop.f32.mrf.mxu0
        %v574 = vadd.f32 %v309, %v573
        %v575 = vpop.f32.mrf.mxu0
        %v576 = vadd.f32 %v305, %v575
        %v577 = vpop.f32.mrf.mxu0
        %v578 = vadd.f32 %v309, %v577
        %579 = vmatprep.mubr.bf16.mxu0 0
        %580 = vmatmul.mubr.bf16.gmra.mxu0 %v482
        %v581 = vpop.f32.mrf.mxu0
        %v582 = vadd.f32 %v305, %v581
        %v583 = vpop.f32.mrf.mxu0
        %v584 = vadd.f32 %v309, %v583
        %v585 = vpop.f32.mrf.mxu0
        %v586 = vadd.f32 %v305, %v585
        %v587 = vpop.f32.mrf.mxu0
        %v588 = vadd.f32 %v309, %v587
        %589 = vmatprep.mubr.bf16.mxu0 0
        %590 = vmatmul.mubr.bf16.gmra.mxu0 %v485
        %v591 = vpop.f32.mrf.mxu0
        %v592 = vadd.f32 %v305, %v591
        %v593 = vpop.f32.mrf.mxu0
        %v594 = vadd.f32 %v309, %v593
        %v595 = vpop.f32.mrf.mxu0
        %v596 = vadd.f32 %v305, %v595
        %v597 = vpop.f32.mrf.mxu0
        %v598 = vadd.f32 %v309, %v597
        %599 = vdwg.mxu0
        %600 = vmatprep.subr.bf16.mxu0 0
        %601 = vmatpush1.bf16.msra.mxu0 0
        %602 = vmatprep.subr.bf16.mxu0 0
        %603 = vmatpush1.bf16.msra.mxu0 0
        %604 = vmatprep.subr.bf16.mxu0 0
        %605 = vmatpush1.bf16.msra.mxu0 0
        %606 = vmatprep.subr.bf16.mxu0 0
        %607 = vmatpush1.bf16.msra.mxu0 0
        %608 = vmatprep.subr.bf16.mxu0 0
        %609 = vmatpush1.bf16.msra.mxu0 0
        %610 = vmatprep.subr.bf16.mxu0 0
        %611 = vmatpush1.bf16.msra.mxu0 0
        %612 = vmatprep.subr.bf16.mxu0 %v441
        %613 = vmatpush1.bf16.msra.mxu0 %v440
        %614 = vmatprep.subr.bf16.mxu0 %v433
        %615 = vmatpush1.bf16.msra.mxu0 %v432
        %616 = vmatprep.subr.bf16.mxu0 0
        %617 = vmatpush2.bf16.msra.mxu0 0
        %618 = vmatprep.subr.bf16.mxu0 0
        %619 = vmatpush2.bf16.msra.mxu0 0
        %620 = vmatprep.subr.bf16.mxu0 0
        %621 = vmatpush2.bf16.msra.mxu0 0
        %622 = vmatprep.subr.bf16.mxu0 0
        %623 = vmatpush2.bf16.msra.mxu0 0
        %624 = vmatprep.subr.bf16.mxu0 0
        %625 = vmatpush2.bf16.msra.mxu0 0
        %626 = vmatprep.subr.bf16.mxu0 0
        %627 = vmatpush2.bf16.msra.mxu0 0
        %628 = vmatprep.subr.bf16.mxu0 0
        %629 = vmatpush2.bf16.msra.mxu0 0
        %630 = vmatprep.subr.bf16.mxu0 0
        %631 = vmatpush2.bf16.msra.mxu0 0
        %632 = vmatprep.mubr.bf16.mxu0 0
        %633 = vmatmul.mubr.bf16.gmra.mxu0 %v464
        %v634 = vpop.f32.mrf.mxu0
        %v635 = vadd.f32 %v313, %v634
        %v636 = vpop.f32.mrf.mxu0
        %v637 = vadd.f32 %v317, %v636
        %v638 = vpop.f32.mrf.mxu0
        %v639 = vadd.f32 %v313, %v638
        %v640 = vpop.f32.mrf.mxu0
        %v641 = vadd.f32 %v317, %v640
        %642 = vmatprep.mubr.bf16.mxu0 0
        %643 = vmatmul.mubr.bf16.gmra.mxu0 %v467
        %v644 = vpop.f32.mrf.mxu0
        %v645 = vadd.f32 %v313, %v644
        %v646 = vpop.f32.mrf.mxu0
        %v647 = vadd.f32 %v317, %v646
        %v648 = vpop.f32.mrf.mxu0
        %v649 = vadd.f32 %v313, %v648
        %v650 = vpop.f32.mrf.mxu0
        %v651 = vadd.f32 %v317, %v650
        %652 = vmatprep.mubr.bf16.mxu0 0
        %653 = vmatmul.mubr.bf16.gmra.mxu0 %v470
        %v654 = vpop.f32.mrf.mxu0
        %v655 = vadd.f32 %v313, %v654
        %v656 = vpop.f32.mrf.mxu0
        %v657 = vadd.f32 %v317, %v656
        %v658 = vpop.f32.mrf.mxu0
        %v659 = vadd.f32 %v313, %v658
        %v660 = vpop.f32.mrf.mxu0
        %v661 = vadd.f32 %v317, %v660
        %662 = vmatprep.mubr.bf16.mxu0 0
        %663 = vmatmul.mubr.bf16.gmra.mxu0 %v473
        %v664 = vpop.f32.mrf.mxu0
        %v665 = vadd.f32 %v313, %v664
        %v666 = vpop.f32.mrf.mxu0
        %v667 = vadd.f32 %v317, %v666
        %v668 = vpop.f32.mrf.mxu0
        %v669 = vadd.f32 %v313, %v668
        %v670 = vpop.f32.mrf.mxu0
        %v671 = vadd.f32 %v317, %v670
        %672 = vmatprep.mubr.bf16.mxu0 0
        %673 = vmatmul.mubr.bf16.gmra.mxu0 %v476
        %v674 = vpop.f32.mrf.mxu0
        %v675 = vadd.f32 %v313, %v674
        %v676 = vpop.f32.mrf.mxu0
        %v677 = vadd.f32 %v317, %v676
        %v678 = vpop.f32.mrf.mxu0
        %v679 = vadd.f32 %v313, %v678
        %v680 = vpop.f32.mrf.mxu0
        %v681 = vadd.f32 %v317, %v680
        %682 = vmatprep.mubr.bf16.mxu0 0
        %683 = vmatmul.mubr.bf16.gmra.mxu0 %v479
        %v684 = vpop.f32.mrf.mxu0
        %v685 = vadd.f32 %v313, %v684
        %v686 = vpop.f32.mrf.mxu0
        %v687 = vadd.f32 %v317, %v686
        %v688 = vpop.f32.mrf.mxu0
        %v689 = vadd.f32 %v313, %v688
        %v690 = vpop.f32.mrf.mxu0
        %v691 = vadd.f32 %v317, %v690
        %692 = vmatprep.mubr.bf16.mxu0 0
        %693 = vmatmul.mubr.bf16.gmra.mxu0 %v482
        %v694 = vpop.f32.mrf.mxu0
        %v695 = vadd.f32 %v313, %v694
        %v696 = vpop.f32.mrf.mxu0
        %v697 = vadd.f32 %v317, %v696
        %v698 = vpop.f32.mrf.mxu0
        %v699 = vadd.f32 %v313, %v698
        %v700 = vpop.f32.mrf.mxu0
        %v701 = vadd.f32 %v317, %v700
        %702 = vmatprep.mubr.bf16.mxu0 0
        %703 = vmatmul.mubr.bf16.gmra.mxu0 %v485
        %v704 = vpop.f32.mrf.mxu0
        %v705 = vadd.f32 %v313, %v704
        %v706 = vpop.f32.mrf.mxu0
        %v707 = vadd.f32 %v317, %v706
        %v708 = vpop.f32.mrf.mxu0
        %v709 = vadd.f32 %v313, %v708
        %v710 = vpop.f32.mrf.mxu0
        %v711 = vadd.f32 %v317, %v710
        %712 = vdwg.mxu0
        %713 = vmatprep.subr.bf16.mxu0 0
        %714 = vmatpush1.bf16.msra.mxu0 0
        %715 = vmatprep.subr.bf16.mxu0 0
        %716 = vmatpush1.bf16.msra.mxu0 0
        %717 = vmatprep.subr.bf16.mxu0 0
        %718 = vmatpush1.bf16.msra.mxu0 0
        %719 = vmatprep.subr.bf16.mxu0 0
        %720 = vmatpush1.bf16.msra.mxu0 0
        %721 = vmatprep.subr.bf16.mxu0 0
        %722 = vmatpush1.bf16.msra.mxu0 0
        %723 = vmatprep.subr.bf16.mxu0 0
        %724 = vmatpush1.bf16.msra.mxu0 0
        %725 = vmatprep.subr.bf16.mxu0 %v443
        %726 = vmatpush1.bf16.msra.mxu0 %v442
        %727 = vmatprep.subr.bf16.mxu0 %v435
        %728 = vmatpush1.bf16.msra.mxu0 %v434
        %729 = vmatprep.subr.bf16.mxu0 0
        %730 = vmatpush2.bf16.msra.mxu0 0
        %731 = vmatprep.subr.bf16.mxu0 0
        %732 = vmatpush2.bf16.msra.mxu0 0
        %733 = vmatprep.subr.bf16.mxu0 0
        %734 = vmatpush2.bf16.msra.mxu0 0
        %735 = vmatprep.subr.bf16.mxu0 0
        %736 = vmatpush2.bf16.msra.mxu0 0
        %737 = vmatprep.subr.bf16.mxu0 0
        %738 = vmatpush2.bf16.msra.mxu0 0
        %739 = vmatprep.subr.bf16.mxu0 0
        %740 = vmatpush2.bf16.msra.mxu0 0
        %741 = vmatprep.subr.bf16.mxu0 0
        %742 = vmatpush2.bf16.msra.mxu0 0
        %743 = vmatprep.subr.bf16.mxu0 0
        %744 = vmatpush2.bf16.msra.mxu0 0
        %745 = vmatprep.mubr.bf16.mxu0 0
        %746 = vmatmul.mubr.bf16.gmra.mxu0 %v464
        %v747 = vpop.f32.mrf.mxu0
        %v748 = vadd.f32 %v321, %v747
        %v749 = vpop.f32.mrf.mxu0
        %v750 = vadd.f32 %v325, %v749
        %v751 = vpop.f32.mrf.mxu0
        %v752 = vadd.f32 %v321, %v751
        %v753 = vpop.f32.mrf.mxu0
        %v754 = vadd.f32 %v325, %v753
        %755 = vmatprep.mubr.bf16.mxu0 0
        %756 = vmatmul.mubr.bf16.gmra.mxu0 %v467
        %v757 = vpop.f32.mrf.mxu0
        %v758 = vadd.f32 %v321, %v757
        %v759 = vpop.f32.mrf.mxu0
        %v760 = vadd.f32 %v325, %v759
        %v761 = vpop.f32.mrf.mxu0
        %v762 = vadd.f32 %v321, %v761
        %v763 = vpop.f32.mrf.mxu0
        %v764 = vadd.f32 %v325, %v763
        %765 = vmatprep.mubr.bf16.mxu0 0
        %766 = vmatmul.mubr.bf16.gmra.mxu0 %v470
        %v767 = vpop.f32.mrf.mxu0
        %v768 = vadd.f32 %v321, %v767
        %v769 = vpop.f32.mrf.mxu0
        %v770 = vadd.f32 %v325, %v769
        %v771 = vpop.f32.mrf.mxu0
        %v772 = vadd.f32 %v321, %v771
        %v773 = vpop.f32.mrf.mxu0
        %v774 = vadd.f32 %v325, %v773
        %775 = vmatprep.mubr.bf16.mxu0 0
        %776 = vmatmul.mubr.bf16.gmra.mxu0 %v473
        %v777 = vpop.f32.mrf.mxu0
        %v778 = vadd.f32 %v321, %v777
        %v779 = vpop.f32.mrf.mxu0
        %v780 = vadd.f32 %v325, %v779
        %v781 = vpop.f32.mrf.mxu0
        %v782 = vadd.f32 %v321, %v781
        %v783 = vpop.f32.mrf.mxu0
        %v784 = vadd.f32 %v325, %v783
        %785 = vmatprep.mubr.bf16.mxu0 0
        %786 = vmatmul.mubr.bf16.gmra.mxu0 %v476
        %v787 = vpop.f32.mrf.mxu0
        %v788 = vadd.f32 %v321, %v787
        %v789 = vpop.f32.mrf.mxu0
        %v790 = vadd.f32 %v325, %v789
        %v791 = vpop.f32.mrf.mxu0
        %v792 = vadd.f32 %v321, %v791
        %v793 = vpop.f32.mrf.mxu0
        %v794 = vadd.f32 %v325, %v793
        %795 = vmatprep.mubr.bf16.mxu0 0
        %796 = vmatmul.mubr.bf16.gmra.mxu0 %v479
        %v797 = vpop.f32.mrf.mxu0
        %v798 = vadd.f32 %v321, %v797
        %v799 = vpop.f32.mrf.mxu0
        %v800 = vadd.f32 %v325, %v799
        %v801 = vpop.f32.mrf.mxu0
        %v802 = vadd.f32 %v321, %v801
        %v803 = vpop.f32.mrf.mxu0
        %v804 = vadd.f32 %v325, %v803
        %805 = vmatprep.mubr.bf16.mxu0 0
        %806 = vmatmul.mubr.bf16.gmra.mxu0 %v482
        %v807 = vpop.f32.mrf.mxu0
        %v808 = vadd.f32 %v321, %v807
        %v809 = vpop.f32.mrf.mxu0
        %v810 = vadd.f32 %v325, %v809
        %v811 = vpop.f32.mrf.mxu0
        %v812 = vadd.f32 %v321, %v811
        %v813 = vpop.f32.mrf.mxu0
        %v814 = vadd.f32 %v325, %v813
        %815 = vmatprep.mubr.bf16.mxu0 0
        %816 = vmatmul.mubr.bf16.gmra.mxu0 %v485
        %v817 = vpop.f32.mrf.mxu0
        %v818 = vadd.f32 %v321, %v817
        %v819 = vpop.f32.mrf.mxu0
        %v820 = vadd.f32 %v325, %v819
        %v821 = vpop.f32.mrf.mxu0
        %v822 = vadd.f32 %v321, %v821
        %v823 = vpop.f32.mrf.mxu0
        %v824 = vadd.f32 %v325, %v823
        %825 = vdwg.mxu0
        %826 = vmatprep.subr.bf16.mxu0 0
        %827 = vmatpush1.bf16.msra.mxu0 0
        %828 = vmatprep.subr.bf16.mxu0 0
        %829 = vmatpush1.bf16.msra.mxu0 0
        %830 = vmatprep.subr.bf16.mxu0 0
        %831 = vmatpush1.bf16.msra.mxu0 0
        %832 = vmatprep.subr.bf16.mxu0 0
        %833 = vmatpush1.bf16.msra.mxu0 0
        %834 = vmatprep.subr.bf16.mxu0 0
        %835 = vmatpush1.bf16.msra.mxu0 0
        %836 = vmatprep.subr.bf16.mxu0 0
        %837 = vmatpush1.bf16.msra.mxu0 0
        %838 = vmatprep.subr.bf16.mxu0 %v445
        %839 = vmatpush1.bf16.msra.mxu0 %v444
        %840 = vmatprep.subr.bf16.mxu0 %v437
        %841 = vmatpush1.bf16.msra.mxu0 %v436
        %842 = vmatprep.subr.bf16.mxu0 0
        %843 = vmatpush2.bf16.msra.mxu0 0
        %844 = vmatprep.subr.bf16.mxu0 0
        %845 = vmatpush2.bf16.msra.mxu0 0
        %846 = vmatprep.subr.bf16.mxu0 0
        %847 = vmatpush2.bf16.msra.mxu0 0
        %848 = vmatprep.subr.bf16.mxu0 0
        %849 = vmatpush2.bf16.msra.mxu0 0
        %850 = vmatprep.subr.bf16.mxu0 0
        %851 = vmatpush2.bf16.msra.mxu0 0
        %852 = vmatprep.subr.bf16.mxu0 0
        %853 = vmatpush2.bf16.msra.mxu0 0
        %854 = vmatprep.subr.bf16.mxu0 0
        %855 = vmatpush2.bf16.msra.mxu0 0
        %856 = vmatprep.subr.bf16.mxu0 0
        %857 = vmatpush2.bf16.msra.mxu0 0
        %858 = vmatprep.mubr.bf16.mxu0 0
        %859 = vmatmul.mubr.bf16.gmra.mxu0 %v464
        %v860 = vpop.f32.mrf.mxu0
        %v861 = vadd.f32 %v329, %v860
        %v862 = vpop.f32.mrf.mxu0
        %v863 = vadd.f32 %v333, %v862
        %v864 = vpop.f32.mrf.mxu0
        %v865 = vadd.f32 %v329, %v864
        %v866 = vpop.f32.mrf.mxu0
        %v867 = vadd.f32 %v333, %v866
        %868 = vmatprep.mubr.bf16.mxu0 0
        %869 = vmatmul.mubr.bf16.gmra.mxu0 %v467
        %v870 = vpop.f32.mrf.mxu0
        %v871 = vadd.f32 %v329, %v870
        %v872 = vpop.f32.mrf.mxu0
        %v873 = vadd.f32 %v333, %v872
        %v874 = vpop.f32.mrf.mxu0
        %v875 = vadd.f32 %v329, %v874
        %v876 = vpop.f32.mrf.mxu0
        %v877 = vadd.f32 %v333, %v876
        %878 = vmatprep.mubr.bf16.mxu0 0
        %879 = vmatmul.mubr.bf16.gmra.mxu0 %v470
        %v880 = vpop.f32.mrf.mxu0
        %v881 = vadd.f32 %v329, %v880
        %v882 = vpop.f32.mrf.mxu0
        %v883 = vadd.f32 %v333, %v882
        %v884 = vpop.f32.mrf.mxu0
        %v885 = vadd.f32 %v329, %v884
        %v886 = vpop.f32.mrf.mxu0
        %v887 = vadd.f32 %v333, %v886
        %888 = vmatprep.mubr.bf16.mxu0 0
        %889 = vmatmul.mubr.bf16.gmra.mxu0 %v473
        %v890 = vpop.f32.mrf.mxu0
        %v891 = vadd.f32 %v329, %v890
        %v892 = vpop.f32.mrf.mxu0
        %v893 = vadd.f32 %v333, %v892
        %v894 = vpop.f32.mrf.mxu0
        %v895 = vadd.f32 %v329, %v894
        %v896 = vpop.f32.mrf.mxu0
        %v897 = vadd.f32 %v333, %v896
        %898 = vmatprep.mubr.bf16.mxu0 0
        %899 = vmatmul.mubr.bf16.gmra.mxu0 %v476
        %v900 = vpop.f32.mrf.mxu0
        %v901 = vadd.f32 %v329, %v900
        %v902 = vpop.f32.mrf.mxu0
        %v903 = vadd.f32 %v333, %v902
        %v904 = vpop.f32.mrf.mxu0
        %v905 = vadd.f32 %v329, %v904
        %v906 = vpop.f32.mrf.mxu0
        %v907 = vadd.f32 %v333, %v906
        %908 = vmatprep.mubr.bf16.mxu0 0
        %909 = vmatmul.mubr.bf16.gmra.mxu0 %v479
        %v910 = vpop.f32.mrf.mxu0
        %v911 = vadd.f32 %v329, %v910
        %v912 = vpop.f32.mrf.mxu0
        %v913 = vadd.f32 %v333, %v912
        %v914 = vpop.f32.mrf.mxu0
        %v915 = vadd.f32 %v329, %v914
        %v916 = vpop.f32.mrf.mxu0
        %v917 = vadd.f32 %v333, %v916
        %918 = vmatprep.mubr.bf16.mxu0 0
        %919 = vmatmul.mubr.bf16.gmra.mxu0 %v482
        %v920 = vpop.f32.mrf.mxu0
        %v921 = vadd.f32 %v329, %v920
        %v922 = vpop.f32.mrf.mxu0
        %v923 = vadd.f32 %v333, %v922
        %v924 = vpop.f32.mrf.mxu0
        %v925 = vadd.f32 %v329, %v924
        %v926 = vpop.f32.mrf.mxu0
        %v927 = vadd.f32 %v333, %v926
        %928 = vmatprep.mubr.bf16.mxu0 0
        %929 = vmatmul.mubr.bf16.gmra.mxu0 %v485
        %v930 = vpop.f32.mrf.mxu0
        %v931 = vadd.f32 %v329, %v930
        %v932 = vpop.f32.mrf.mxu0
        %v933 = vadd.f32 %v333, %v932
        %v934 = vpop.f32.mrf.mxu0
        %v935 = vadd.f32 %v329, %v934
        %v936 = vpop.f32.mrf.mxu0
        %v937 = vadd.f32 %v333, %v936
        %938 = vdwg.mxu0
        %939 = vst [vmem:[%s256] sm:$0xff] %v522
        %940 = vst [vmem:[%s256 + $0x8] sm:$0xff] %v524
        %941 = vst [vmem:[%s256 + $0x10] sm:$0xff] %v635
        %942 = vst [vmem:[%s256 + $0x18] sm:$0xff] %v637
        %943 = vst [vmem:[%s256 + $0x20] sm:$0xff] %v748
        %944 = vst [vmem:[%s256 + $0x28] sm:$0xff] %v750
        %945 = vst [vmem:[%s256 + $0x30] sm:$0xff] %v861
        %946 = vst [vmem:[%s256 + $0x38] sm:$0xff] %v863
        %947 = vst [vmem:[%s256 + $0x40] sm:$0xff] %v526
        %948 = vst [vmem:[%s256 + $0x48] sm:$0xff] %v528
        %949 = vst [vmem:[%s256 + $0x50] sm:$0xff] %v639
        %950 = vst [vmem:[%s256 + $0x58] sm:$0xff] %v641
        %951 = vst [vmem:[%s256 + $0x60] sm:$0xff] %v752
        %952 = vst [vmem:[%s256 + $0x68] sm:$0xff] %v754
        %953 = vst [vmem:[%s256 + $0x70] sm:$0xff] %v865
        %954 = vst [vmem:[%s256 + $0x78] sm:$0xff] %v867
        %955 = vst [vmem:[%s256 + $0x80] sm:$0xff] %v532
        %956 = vst [vmem:[%s256 + $0x88] sm:$0xff] %v534
        %957 = vst [vmem:[%s256 + $0x90] sm:$0xff] %v645
        %958 = vst [vmem:[%s256 + $0x98] sm:$0xff] %v647
        %959 = vst [vmem:[%s256 + $0xa0] sm:$0xff] %v758
        %960 = vst [vmem:[%s256 + $0xa8] sm:$0xff] %v760
        %961 = vst [vmem:[%s256 + $0xb0] sm:$0xff] %v871
        %962 = vst [vmem:[%s256 + $0xb8] sm:$0xff] %v873
        %963 = vst [vmem:[%s256 + $0xc0] sm:$0xff] %v536
        %964 = vst [vmem:[%s256 + $0xc8] sm:$0xff] %v538
        %965 = vst [vmem:[%s256 + $0xd0] sm:$0xff] %v649
        %966 = vst [vmem:[%s256 + $0xd8] sm:$0xff] %v651
        %967 = vst [vmem:[%s256 + $0xe0] sm:$0xff] %v762
        %968 = vst [vmem:[%s256 + $0xe8] sm:$0xff] %v764
        %969 = vst [vmem:[%s256 + $0xf0] sm:$0xff] %v875
        %970 = vst [vmem:[%s256 + $0xf8] sm:$0xff] %v877
        %971 = vst [vmem:[%s256 + $0x100] sm:$0xff] %v542
        %972 = vst [vmem:[%s256 + $0x108] sm:$0xff] %v544
        %973 = vst [vmem:[%s256 + $0x110] sm:$0xff] %v655
        %974 = vst [vmem:[%s256 + $0x118] sm:$0xff] %v657
        %975 = vst [vmem:[%s256 + $0x120] sm:$0xff] %v768
        %976 = vst [vmem:[%s256 + $0x128] sm:$0xff] %v770
        %977 = vst [vmem:[%s256 + $0x130] sm:$0xff] %v881
        %978 = vst [vmem:[%s256 + $0x138] sm:$0xff] %v883
        %979 = vst [vmem:[%s256 + $0x140] sm:$0xff] %v546
        %980 = vst [vmem:[%s256 + $0x148] sm:$0xff] %v548
        %981 = vst [vmem:[%s256 + $0x150] sm:$0xff] %v659
        %982 = vst [vmem:[%s256 + $0x158] sm:$0xff] %v661
        %983 = vst [vmem:[%s256 + $0x160] sm:$0xff] %v772
        %984 = vst [vmem:[%s256 + $0x168] sm:$0xff] %v774
        %985 = vst [vmem:[%s256 + $0x170] sm:$0xff] %v885
        %986 = vst [vmem:[%s256 + $0x178] sm:$0xff] %v887
        %987 = vst [vmem:[%s256 + $0x180] sm:$0xff] %v552
        %988 = vst [vmem:[%s256 + $0x188] sm:$0xff] %v554
        %989 = vst [vmem:[%s256 + $0x190] sm:$0xff] %v665
        %990 = vst [vmem:[%s256 + $0x198] sm:$0xff] %v667
        %991 = vst [vmem:[%s256 + $0x1a0] sm:$0xff] %v778
        %992 = vst [vmem:[%s256 + $0x1a8] sm:$0xff] %v780
        %993 = vst [vmem:[%s256 + $0x1b0] sm:$0xff] %v891
        %994 = vst [vmem:[%s256 + $0x1b8] sm:$0xff] %v893
        %995 = vst [vmem:[%s256 + $0x1c0] sm:$0xff] %v556
        %996 = vst [vmem:[%s256 + $0x1c8] sm:$0xff] %v558
        %997 = vst [vmem:[%s256 + $0x1d0] sm:$0xff] %v669
        %998 = vst [vmem:[%s256 + $0x1d8] sm:$0xff] %v671
        %999 = vst [vmem:[%s256 + $0x1e0] sm:$0xff] %v782
        %1000 = vst [vmem:[%s256 + $0x1e8] sm:$0xff] %v784
        %1001 = vst [vmem:[%s256 + $0x1f0] sm:$0xff] %v895
        %1002 = vst [vmem:[%s256 + $0x1f8] sm:$0xff] %v897
        %1003 = vst [vmem:[%s256 + $0x200] sm:$0xff] %v562
        %1004 = vst [vmem:[%s256 + $0x208] sm:$0xff] %v564
        %1005 = vst [vmem:[%s256 + $0x210] sm:$0xff] %v675
        %1006 = vst [vmem:[%s256 + $0x218] sm:$0xff] %v677
        %1007 = vst [vmem:[%s256 + $0x220] sm:$0xff] %v788
        %1008 = vst [vmem:[%s256 + $0x228] sm:$0xff] %v790
        %1009 = vst [vmem:[%s256 + $0x230] sm:$0xff] %v901
        %1010 = vst [vmem:[%s256 + $0x238] sm:$0xff] %v903
        %1011 = vst [vmem:[%s256 + $0x240] sm:$0xff] %v566
        %1012 = vst [vmem:[%s256 + $0x248] sm:$0xff] %v568
        %1013 = vst [vmem:[%s256 + $0x250] sm:$0xff] %v679
        %1014 = vst [vmem:[%s256 + $0x258] sm:$0xff] %v681
        %1015 = vst [vmem:[%s256 + $0x260] sm:$0xff] %v792
        %1016 = vst [vmem:[%s256 + $0x268] sm:$0xff] %v794
        %1017 = vst [vmem:[%s256 + $0x270] sm:$0xff] %v905
        %1018 = vst [vmem:[%s256 + $0x278] sm:$0xff] %v907
        %1019 = vst [vmem:[%s256 + $0x280] sm:$0xff] %v572
        %1020 = vst [vmem:[%s256 + $0x288] sm:$0xff] %v574
        %1021 = vst [vmem:[%s256 + $0x290] sm:$0xff] %v685
        %1022 = vst [vmem:[%s256 + $0x298] sm:$0xff] %v687
        %1023 = vst [vmem:[%s256 + $0x2a0] sm:$0xff] %v798
        %1024 = vst [vmem:[%s256 + $0x2a8] sm:$0xff] %v800
        %1025 = vst [vmem:[%s256 + $0x2b0] sm:$0xff] %v911
        %1026 = vst [vmem:[%s256 + $0x2b8] sm:$0xff] %v913
        %1027 = vst [vmem:[%s256 + $0x2c0] sm:$0xff] %v576
        %1028 = vst [vmem:[%s256 + $0x2c8] sm:$0xff] %v578
        %1029 = vst [vmem:[%s256 + $0x2d0] sm:$0xff] %v689
        %1030 = vst [vmem:[%s256 + $0x2d8] sm:$0xff] %v691
        %1031 = vst [vmem:[%s256 + $0x2e0] sm:$0xff] %v802
        %1032 = vst [vmem:[%s256 + $0x2e8] sm:$0xff] %v804
        %1033 = vst [vmem:[%s256 + $0x2f0] sm:$0xff] %v915
        %1034 = vst [vmem:[%s256 + $0x2f8] sm:$0xff] %v917
        %1035 = vst [vmem:[%s256 + $0x300] sm:$0xff] %v582
        %1036 = vst [vmem:[%s256 + $0x308] sm:$0xff] %v584
        %1037 = vst [vmem:[%s256 + $0x310] sm:$0xff] %v695
        %1038 = vst [vmem:[%s256 + $0x318] sm:$0xff] %v697
        %1039 = vst [vmem:[%s256 + $0x320] sm:$0xff] %v808
        %1040 = vst [vmem:[%s256 + $0x328] sm:$0xff] %v810
        %1041 = vst [vmem:[%s256 + $0x330] sm:$0xff] %v921
        %1042 = vst [vmem:[%s256 + $0x338] sm:$0xff] %v923
        %1043 = vst [vmem:[%s256 + $0x340] sm:$0xff] %v586
        %1044 = vst [vmem:[%s256 + $0x348] sm:$0xff] %v588
        %1045 = vst [vmem:[%s256 + $0x350] sm:$0xff] %v699
        %1046 = vst [vmem:[%s256 + $0x358] sm:$0xff] %v701
        %1047 = vst [vmem:[%s256 + $0x360] sm:$0xff] %v812
        %1048 = vst [vmem:[%s256 + $0x368] sm:$0xff] %v814
        %1049 = vst [vmem:[%s256 + $0x370] sm:$0xff] %v925
        %1050 = vst [vmem:[%s256 + $0x378] sm:$0xff] %v927
        %1051 = vst [vmem:[%s256 + $0x380] sm:$0xff] %v592
        %1052 = vst [vmem:[%s256 + $0x388] sm:$0xff] %v594
        %1053 = vst [vmem:[%s256 + $0x390] sm:$0xff] %v705
        %1054 = vst [vmem:[%s256 + $0x398] sm:$0xff] %v707
        %1055 = vst [vmem:[%s256 + $0x3a0] sm:$0xff] %v818
        %1056 = vst [vmem:[%s256 + $0x3a8] sm:$0xff] %v820
        %1057 = vst [vmem:[%s256 + $0x3b0] sm:$0xff] %v931
        %1058 = vst [vmem:[%s256 + $0x3b8] sm:$0xff] %v933
        %1059 = vst [vmem:[%s256 + $0x3c0] sm:$0xff] %v596
        %1060 = vst [vmem:[%s256 + $0x3c8] sm:$0xff] %v598
        %1061 = vst [vmem:[%s256 + $0x3d0] sm:$0xff] %v709
        %1062 = vst [vmem:[%s256 + $0x3d8] sm:$0xff] %v711
        %1063 = vst [vmem:[%s256 + $0x3e0] sm:$0xff] %v822
        %1064 = vst [vmem:[%s256 + $0x3e8] sm:$0xff] %v824
        %1065 = vst [vmem:[%s256 + $0x3f0] sm:$0xff] %v935
        %1066 = vst [vmem:[%s256 + $0x3f8] sm:$0xff] %v937
        %s1067 = sand.u32 %s123, 1
        %s1068 = scalar_lea.sflag [#allocation4], %s1067
        %s1069 = sand.u32 %s123, 1
        %s1070 = smul.addr %s1069, 1024
        %s1071 = scalar_lea.vmem [#allocation7], %s1070
        // Predicated region
        $region41: #{tpu_custom_call.1} parent=31 // pred_check
          %p1072 = pneg %p133
        $region42: #{tpu_custom_call.1} parent=31 // pred_check_branch
          %1074 = sbr.rel (%p1072) target = $region44
        $region43: #{tpu_custom_call.1} parent=31 // pred_region
          %s1075 = smul.u32 16, %s28
          %s1076 = smul.u32 8, %s27
          %s1078 = ssub.s32 16384, 16384
          %1079 = vsyncadd %s1068, %s1078
          %s1080 = smul.addr %s1075, 24
          %s1081 = sadd.s32 %s1076, %s1080
          %s1082 = smul.addr %s1081, 128
          %s1083 = scalar_lea.hbm %s3, %s1082
          %s1084 = sshll.u32 %s1071, 4
          %s1085 = int_to_ptr.vmem [resolvable:$true] %s1084
          %1090 = dma.vmem_to_hbm [thread:$0]  %s1085, 16384, %s1083, %s1068, 1024, 3072, 64
        $region44: #{tpu_custom_call.1} parent=31 // pred_fallthru
          _
      $region32: #{tpu_custom_call.1} parent=5 // pred_fallthru
        _
      %p1091 = scmp.le.s32.totalorder 2, %s18
      // Predicated region
      $region45: #{tpu_custom_call.1} parent=5 // pred_check
        %p1092 = pneg %p1091
      $region46: #{tpu_custom_call.1} parent=5 // pred_check_branch
        %1094 = sbr.rel (%p1092) target = $region48
      $region47: #{tpu_custom_call.1} parent=5 // pred_region
        %s1095 = ssub.s32 %s18, 2
        // Predicated region
        $region49: #{tpu_custom_call.1} parent=47 // pred_check
          %p1096 = pneg %p139
        $region50: #{tpu_custom_call.1} parent=47 // pred_check_branch
          %1098 = sbr.rel (%p1096) target = $region52
        $region51: #{tpu_custom_call.1} parent=47 // pred_region
          %s1099 = sand.u32 %s124, 1
          %s1100 = scalar_lea.sflag [#allocation4], %s1099
          %s1101 = sand.u32 %s124, 1
          %s1102 = smul.addr %s1101, 1024
          %s1103 = scalar_lea.vmem [#allocation7], %s1102
          %1104 = dma.done %s1100, 16384
        $region52: #{tpu_custom_call.1} parent=47 // pred_fallthru
          _
      $region48: #{tpu_custom_call.1} parent=5 // pred_fallthru
        _
    $region6: #{tpu_custom_call.1} parent=1 // loop_footer
      %s22 = sadd.s32 1, %s18
    $region7: #{tpu_custom_call.1} parent=1 // loop_footer_branch
      %17 = sbr.rel target = $region3
    $region8: #{tpu_custom_call.1} parent=1 // loop_exit
      _
    %1105 = vsyncpa [#allocation3], 1
    %s1106 = scalar_lea.sflag [#allocation3], 1
    %1107 = vsyncpa %s1106, 1
    %1108 = vsyncpa [#allocation6], 1
    %s1109 = scalar_lea.sflag [#allocation6], 1
    %1110 = vsyncpa %s1109, 1
    %1111 = vsyncpa [#allocation4], 1
    %s1112 = scalar_lea.sflag [#allocation4], 1
    %1113 = vsyncpa %s1112, 1

</llo_original>
